<compile_context>
chip_gen: v5e
topology: v5e:2x2
jax: 0.10.0
libtpu: 0.0.40
codegen_flags: <defaults>
</compile_context>

<pallas_src>
import jax
import jax.numpy as jnp
from jax.experimental import pallas as pl
from jax.experimental.pallas import tpu as pltpu

D_TKBC = 32        # tkbc embedding dim (hidden)
D_BERT = 768       # RoBERTa hidden size (hard-coded nn.Linear(768, ...) in module)
NUM_BASES = 4      # self.num_bases


def _round_up(n, m):
    return ((n + m - 1) // m) * m


# ----------------------------- Pallas kernels ------------------------------

def _linear_kernel(x_ref, w_ref, b_ref, o_ref):
    acc = jnp.dot(x_ref[...], w_ref[...], preferred_element_type=jnp.float32)
    o_ref[...] = (acc + b_ref[...]).astype(o_ref.dtype)


def pallas_linear(x, w_bf16, b_f32, tm=512):
    """y = x @ w + b, tiled over rows, bf16 MXU operands, f32 accumulation.

    x:[M,K] (any float dtype, cast to bf16), w:[K,N] bf16, b:[N] f32 -> [M,N] f32.
    Weights/bias stay VMEM-resident; activation rows stream in TM-row tiles.
    M is NOT padded: grid = cdiv(M, TM) and Pallas masks the partial last
    block (K is full inside each block, so valid rows are uncontaminated).
    The row axis is 'parallel' so v7x can shard it across its two TensorCores.
    """
    M, K = x.shape
    N = w_bf16.shape[1]
    x = x.astype(jnp.bfloat16)
    TM = M if M <= tm else tm
    return pl.pallas_call(
        _linear_kernel,
        out_shape=jax.ShapeDtypeStruct((M, N), jnp.float32),
        grid=(pl.cdiv(M, TM),),
        in_specs=[pl.BlockSpec((TM, K), lambda i: (i, 0)),
                  pl.BlockSpec((K, N), lambda i: (0, 0)),
                  pl.BlockSpec((1, N), lambda i: (0, 0))],
        out_specs=pl.BlockSpec((TM, N), lambda i: (i, 0)),
        compiler_params=pltpu.CompilerParams(
            dimension_semantics=("parallel",)),
    )(x, w_bf16, b_f32.reshape(1, N).astype(jnp.float32))


def _score_kernel(p_ref, e_ref, o_ref):
    # pred arrives already normalized and pre-scaled by 30 (bf16); table tile
    # is pre-normalized bf16, feature-major -> a single lane-dense MXU matmul.
    o_ref[...] = jnp.dot(p_ref[...], e_ref[...],
                         preferred_element_type=jnp.float32)


def pallas_cosine_score(pred, emb_norm_T, n_valid, tn=32768):
    """score[b, n] = 30 * cos_sim(pred[b], emb[n]), tiled over table columns.

    emb_norm_T is the pre-normalized bf16 table stored feature-major
    [D, Nemb_pad] (padded to a multiple of 128 columns at prep time).  pred is
    normalized (eps-clamped like torch cosine_similarity) and scaled by 30
    ONCE here, outside the grid loop.  TN=32768 keeps each table tile at
    D*TN*2 = 2 MiB (4 MiB double-buffered), well within v5e/v6e/v7x scoped
    VMEM while amortizing per-grid-step pipeline overhead.
    """
    B, D = pred.shape
    nemb_pad = emb_norm_T.shape[1]
    p = pred.astype(jnp.float32)
    nrm = jnp.sqrt(jnp.sum(p * p, axis=-1, keepdims=True))
    pn = ((p / jnp.maximum(nrm, 1e-8)) * 30.0).astype(jnp.bfloat16)
    TN = min(tn, nemb_pad)
    return pl.pallas_call(
        _score_kernel,
        out_shape=jax.ShapeDtypeStruct((B, n_valid), jnp.float32),
        grid=(pl.cdiv(nemb_pad, TN),),
        in_specs=[pl.BlockSpec((B, D), lambda i: (0, 0)),
                  pl.BlockSpec((D, TN), lambda i: (0, i))],
        out_specs=pl.BlockSpec((B, TN), lambda i: (0, i)),
        compiler_params=pltpu.CompilerParams(
            dimension_semantics=("parallel",)),
    )(pn, emb_norm_T)


# ------------------------- one-time parameter prep --------------------------

def prepare_params(params):
    """Build fused/padded bf16 weights and the normalized table ONCE.

    Everything here is static at inference time; doing it per forward would
    re-read the whole embedding table and re-build fused weights every call.
    """
    D = params["entity_time_embedding"].shape[1]
    prepared = dict(params)

    # Fused question projection: linear | lin_ques_for_attn | prob_select.
    n_fused = 2 * D + 1
    n_pad = _round_up(n_fused, 128)
    w = jnp.zeros((D_BERT, n_pad), jnp.float32)
    w = w.at[:, :D].set(params["linear_w"])
    w = w.at[:, D:2 * D].set(params["lin_attn_w"])
    w = w.at[:, 2 * D:2 * D + 1].set(params["prob_w"])
    b = jnp.zeros((n_pad,), jnp.float32)
    b = b.at[:D].set(params["linear_b"])
    b = b.at[D:2 * D].set(params["lin_attn_b"])
    b = b.at[2 * D:2 * D + 1].set(params["prob_b"])
    prepared["q_w_fused"] = w.astype(jnp.bfloat16)
    prepared["q_b_fused"] = b

    # Per-layer: all basis-decomposed relation transforms + self-loop collapsed
    # into ONE lane-dense [Din, (R+1)*Dout] matrix (padded to x128 columns).
    def prep_layer(lp):
        comp, bases = lp["comp"], lp["bases"]
        w_self, bias = lp["w_self"], lp["bias"]
        R = comp.shape[0]
        Din, Dout = w_self.shape
        w_rel = jnp.einsum("rb,bio->rio", comp, bases)            # [R, Din, Dout]
        w_big = jnp.concatenate(
            [w_rel.transpose(1, 0, 2).reshape(Din, R * Dout), w_self], axis=1)
        b_big = jnp.concatenate(
            [jnp.zeros((R * Dout,), jnp.float32), bias.astype(jnp.float32)])
        n_cols = (R + 1) * Dout
        cpad = _round_up(n_cols, 128)
        if cpad != n_cols:
            w_big = jnp.pad(w_big, ((0, 0), (0, cpad - n_cols)))
            b_big = jnp.pad(b_big, (0, cpad - n_cols))
        return {"w": w_big.astype(jnp.bfloat16), "b": b_big,
                "n_rel": R * Dout, "dout": Dout, "n_cols": n_cols}

    prepared["conv1_fused"] = prep_layer(params["conv1"])
    prepared["conv2_fused"] = prep_layer(params["conv2"])

    # Pre-normalized bf16 table, feature-major [D, Nemb_pad] (cached; never
    # recomputed per forward).  Columns padded to a multiple of 128 with zeros.
    emb = params["entity_time_embedding"].astype(jnp.float32)
    nrm = jnp.sqrt(jnp.sum(emb * emb, axis=-1, keepdims=True))
    emb_n_t = (emb / jnp.maximum(nrm, 1e-8)).T                    # [D, Nemb]
    nemb = emb.shape[0]
    nemb_pad = _round_up(nemb, 128)
    if nemb_pad != nemb:
        emb_n_t = jnp.pad(emb_n_t, ((0, 0), (0, nemb_pad - nemb)))
    prepared["emb_norm_T"] = emb_n_t.astype(jnp.bfloat16)
    return prepared


# --------------------------- TwiRGCN layer / model --------------------------

def twirgcn_layer(fused, x, edge_index, edge_type, st_emb, et_emb,
                  ques_time_emb, edge_norm):
    # TODO(synk): TwiRGCN_Layer source is not included in the reference; this
    # implements the paper's basis-decomposed RGCN with a per-edge sigmoid
    # question/time gate (consistent with the layer's call signature).
    N = x.shape[0]
    Dout = fused["dout"]
    n_rel = fused["n_rel"]

    h_all = pallas_linear(x, fused["w"], fused["b"])[:, :fused["n_cols"]]
    h_rel = h_all[:, :n_rel].reshape(N, n_rel // Dout, Dout)      # [N, R, Dout]
    self_h = h_all[:, n_rel:]                                     # [N, Dout]

    src, dst = edge_index[0], edge_index[1]
    msg = h_rel[src, edge_type]                                   # [E, Dout]
    gate = jax.nn.sigmoid(
        jnp.sum(ques_time_emb * 0.5 * (st_emb + et_emb), axis=-1, keepdims=True))
    msg = msg * gate * edge_norm[:, None]

    # Scatter-add as a one-hot MXU matmul (XLA scatter-add serializes on TPU).
    # TODO(synk): for very large E, swap for a sorted-by-dst Pallas segmented sum.
    onehot = jax.nn.one_hot(dst, N, dtype=jnp.float32)            # [E, N]
    agg = jnp.einsum("en,ed->nd", onehot, msg)
    return agg + self_h


def twirgcn_forward(params, batch):
    emb = params["entity_time_embedding"]                # [num_ent + num_time, D]
    num_entities = params["num_entities"]
    D = emb.shape[1]

    # TODO(synk): RoBERTa encoder (getQuestionEmbedding) is not reimplemented;
    # its CLS output is provided directly as `ques_emb_bert`.
    ques_emb_bert = batch["ques_emb_bert"]               # [B, 768]
    B = ques_emb_bert.shape[0]
    E = batch["edge_type"].shape[0]

    # Fused 768 -> {D, D, 1} projection: one lane-dense [768, 128] matmul with
    # weights precomputed in prepare_params (BERT activation read once).
    fused = pallas_linear(ques_emb_bert, params["q_w_fused"], params["q_b_fused"])
    question_embedding = fused[:, :D]                               # [B, D]
    ques_attn_proj = fused[:, D:2 * D]                              # [B, D]
    p_ent = jax.nn.sigmoid(fused[:, 2 * D:2 * D + 1])               # [B, 1]

    # vec_to_idx_vex + lin_ques_for_attn: project FIRST (B rows), then gather
    # per edge (a linear commutes with a row gather) -> D-wide rows, not 768.
    edge_batch_idx = jnp.repeat(jnp.arange(B), batch["edges_in_batch"],
                                total_repeat_length=E)
    time_for_edge_attn = ques_attn_proj[edge_batch_idx]             # [E, D]

    # trgcn_attn_forward_pass
    st = emb[batch["start_time"] + num_entities]
    et = emb[batch["end_time"] + num_entities]
    x = emb[batch["x"]]
    x = jax.nn.relu(twirgcn_layer(params["conv1_fused"], x, batch["edge_index"],
                                  batch["edge_type"], st, et,
                                  time_for_edge_attn, batch["edge_norm"]))
    # F.dropout(p=0.3, training=False) is the identity at inference time.
    subgraph_entity_emb = twirgcn_layer(params["conv2_fused"], x,
                                        batch["edge_index"], batch["edge_type"],
                                        st, et, time_for_edge_attn,
                                        batch["edge_norm"])

    subgraph_time_emb = emb[batch["uniq_times"] + num_entities]

    zero = jnp.zeros((1, D), jnp.float32)
    sg_ent_z = jnp.concatenate([subgraph_entity_emb, zero], axis=0)
    sg_time_z = jnp.concatenate([subgraph_time_emb.astype(jnp.float32), zero],
                                axis=0)

    # padding_index_vector_with_neg_one: -1 padding indexes the trailing zero
    # row (mirrors the reference helper's zero-row append + -1 mapping).
    pe = batch["padded_uniq_entities"]
    pt = batch["padded_uniq_times"]
    pe = jnp.where(pe < 0, sg_ent_z.shape[0] - 1, pe)
    pt = jnp.where(pt < 0, sg_time_z.shape[0] - 1, pt)
    pooled_entity_emb = jnp.sum(sg_ent_z[pe], axis=1) / batch["num_uniq_entities"]
    pooled_time_emb = jnp.sum(sg_time_z[pt], axis=1) / batch["num_uniq_times"]

    # gating branch (no_gating == 0)
    predicted = (question_embedding + pooled_entity_emb * p_ent
                 + pooled_time_emb * (1.0 - p_ent)) / 3.0

    # final_score = cosine_similarity_batched(pred, emb.T) * 30, against the
    # cached pre-normalized feature-major table.
    return pallas_cosine_score(predicted, params["emb_norm_T"],
                               n_valid=emb.shape[0])


# ------------------------------- init / main --------------------------------

def init_params(key, num_entities, num_times, num_relations):
    D = D_TKBC
    keys = jax.random.split(key, 8)

    def dense(k, shape, scale=None):
        if scale is None:
            scale = 1.0 / float(jnp.sqrt(float(shape[0])))
        return jax.random.normal(k, shape, jnp.float32) * scale

    def layer(k):
        ks = jax.random.split(k, 4)
        return {"comp": dense(ks[0], (num_relations, NUM_BASES), 0.5),
                "bases": dense(ks[1], (NUM_BASES, D, D), 0.1),
                "w_self": dense(ks[2], (D, D), 0.1),
                "bias": jnp.zeros((D,), jnp.float32)}

    return {
        "num_entities": num_entities,
        "entity_time_embedding": dense(keys[0], (num_entities + num_times, D), 1.0),
        "linear_w": dense(keys[1], (D_BERT, D)),
        "linear_b": jnp.zeros((D,), jnp.float32),
        "lin_attn_w": dense(keys[2], (D_BERT, D)),
        "lin_attn_b": jnp.zeros((D,), jnp.float32),
        "prob_w": dense(keys[3], (D_BERT, 1)),
        "prob_b": jnp.zeros((1,), jnp.float32),
        "conv1": layer(keys[4]),
        "conv2": layer(keys[5]),
    }


if __name__ == "__main__":
    key = jax.random.PRNGKey(0)
    num_entities, num_times, num_relations = 20, 10, 3
    B = 2        # batch (questions)
    N_sub = 12   # unique subgraph entities
    E = 16       # subgraph edges
    T_sub = 5    # unique subgraph times

    k_param, k_q, k_idx, k_norm = jax.random.split(key, 4)
    params = prepare_params(init_params(k_param, num_entities, num_times,
                                        num_relations))

    ks = jax.random.split(k_idx, 6)
    batch = {
        "ques_emb_bert": jax.random.normal(k_q, (B, D_BERT), jnp.float32),
        "x": jax.random.randint(ks[0], (N_sub,), 0, num_entities),
        "edge_index": jax.random.randint(ks[1], (2, E), 0, N_sub),
        "edge_type": jax.random.randint(ks[2], (E,), 0, num_relations),
        "start_time": jax.random.randint(ks[3], (E,), 0, num_times),
        "end_time": jax.random.randint(ks[4], (E,), 0, num_times),
        "edge_norm": jnp.abs(jax.random.normal(k_norm, (E,), jnp.float32)) + 0.1,
        "edges_in_batch": jnp.array([10, 6], jnp.int32),
        "uniq_times": jax.random.randint(ks[5], (T_sub,), 0, num_times),
        # per-question pooled index sets, -1 padded (maps to the zero row)
        "padded_uniq_entities": jnp.array([[0, 1, 2, 3, -1, -1],
                                           [4, 5, 6, -1, -1, -1]], jnp.int32),
        "num_uniq_entities": jnp.array([[4.0], [3.0]], jnp.float32),
        "padded_uniq_times": jnp.array([[0, 1, -1],
                                        [2, 3, 4]], jnp.int32),
        "num_uniq_times": jnp.array([[2.0], [3.0]], jnp.float32),
    }

    score = twirgcn_forward(params, batch)
    score = jax.block_until_ready(score)
    assert score.shape == (B, num_entities + num_times)
    assert bool(jnp.all(jnp.isfinite(score)))
    print("KERNEL_OK")
</pallas_src>

<mosaic_0001>
module attributes {stable_mosaic.version = 11 : i64} {
  func.func @_linear_kernel(%arg0: i32, %arg1: memref<2x768xbf16, #tpu.memory_space<vmem>>, %arg2: memref<768x128xbf16, #tpu.memory_space<vmem>>, %arg3: memref<1x128xf32, #tpu.memory_space<vmem>>, %arg4: memref<2x128xf32, #tpu.memory_space<vmem>>) attributes {dimension_semantics = [#tpu.dimension_semantics<parallel>], iteration_bounds = array<i64: 1>, scalar_prefetch = 0 : i64, scratch_operands = 0 : i64, tpu.core_type = #tpu.core_type<tc>, window_params = [{transform_indices = @transform_0, window_bounds = array<i64: 2, 768>}, {pipeline_mode = #tpu.pipeline_mode<synchronous>, transform_indices = @transform_1, window_bounds = array<i64: 768, 128>}, {pipeline_mode = #tpu.pipeline_mode<synchronous>, transform_indices = @transform_2, window_bounds = array<i64: 1, 128>}, {transform_indices = @transform_3, window_bounds = array<i64: 2, 128>}]} {
    %c0 = arith.constant 0 : index
    %c0_0 = arith.constant 0 : index
    %0 = vector.load %arg1[%c0, %c0_0] : memref<2x768xbf16, #tpu.memory_space<vmem>>, vector<2x768xbf16>
    %c0_1 = arith.constant 0 : index
    %c0_2 = arith.constant 0 : index
    %1 = vector.load %arg2[%c0_1, %c0_2] : memref<768x128xbf16, #tpu.memory_space<vmem>>, vector<768x128xbf16>
    %cst = arith.constant dense<0.000000e+00> : vector<2x128xf32>
    %2 = tpu.matmul %0, %1, %cst {dimension_numbers = #tpu.dot_dimension_numbers<[1], [0], [0], [1], [0, 0, 1, 1], [], []>} : vector<2x768xbf16>, vector<768x128xbf16>, vector<2x128xf32> -> vector<2x128xf32>
    %c0_3 = arith.constant 0 : index
    %c0_4 = arith.constant 0 : index
    %3 = vector.load %arg3[%c0_3, %c0_4] : memref<1x128xf32, #tpu.memory_space<vmem>>, vector<1x128xf32>
    %4 = vector.broadcast %3 : vector<1x128xf32> to vector<2x128xf32>
    %5 = arith.addf %2, %4 : vector<2x128xf32>
    %c0_5 = arith.constant 0 : index
    %c0_6 = arith.constant 0 : index
    %6 = vector.load %arg4[%c0_5, %c0_6] : memref<2x128xf32, #tpu.memory_space<vmem>>, vector<2x128xf32>
    tpu.vector_store %arg4[%c0_5, %c0_6], %5 {strides = array<i32>} : memref<2x128xf32, #tpu.memory_space<vmem>>, vector<2x128xf32>,
    return
  }
  func.func @transform_0(%arg0: i32) -> (i32, i32) {
    %c0_i32 = arith.constant 0 : i32
    %c0_i32_0 = arith.constant 0 : i32
    return %arg0, %c0_i32 : i32, i32
  }
  func.func @transform_1(%arg0: i32) -> (i32, i32) {
    %c0_i32 = arith.constant 0 : i32
    %c0_i32_0 = arith.constant 0 : i32
    %c0_i32_1 = arith.constant 0 : i32
    return %c0_i32, %c0_i32_0 : i32, i32
  }
  func.func @transform_2(%arg0: i32) -> (i32, i32) {
    %c0_i32 = arith.constant 0 : i32
    %c0_i32_0 = arith.constant 0 : i32
    %c0_i32_1 = arith.constant 0 : i32
    return %c0_i32, %c0_i32_0 : i32, i32
  }
  func.func @transform_3(%arg0: i32) -> (i32, i32) {
    %c0_i32 = arith.constant 0 : i32
    %c0_i32_0 = arith.constant 0 : i32
    return %arg0, %c0_i32 : i32, i32
  }
}

</mosaic_0001>

<llo_original>
// kernel: tpu_custom_call.1
$region0: #{tpu_custom_call.1}
  #allocation0 [shape = 'u32[]', space=smem, size = 0x4, offset = 0x4, fixed_abs, tag = 'smem constant byte address 0x4 - core index']
  #allocation1 [shape = 'u32[72,128]{1,0:T(1,128)}', space=vmem, size = 0x9000, scoped, tag = 'internal scratch']
  %s0 = inlined_call_operand.hbm [shape: bf16[2,768], index: 0, kind: input, shape index: {}]
  %s1 = inlined_call_operand.hbm [shape: bf16[768,128], index: 1, kind: input, shape index: {}]
  %s2 = inlined_call_operand.vmem [shape: f32[1,128], index: 2, kind: input, shape index: {}]
  %s3 = inlined_call_operand.hbm [shape: f32[2,128], index: 3, kind: output, shape index: {}]
  %s4 = sld [smem:[#allocation0]]
  $region30: #{tpu_custom_call.1} parent=0
    _
  %s6 = ssub.s32 1, %s4
  %s7 = scalar_select 0, %s6, %s4
  $region1: #{tpu_custom_call.1} parent=0
    #allocation2 [shape = 'u8[3072]{0}', space=vmem, size = 0xc00, scoped, tag = 'input window, operand 0, single buffered']
    #allocation3 [shape = 's32[1]{0}', space=sflag, size = 0x4, scoped, tag = 'scoped memory for tpu_custom_call.1']
    #allocation4 [shape = 's32[1]{0}', space=sflag, size = 0x4, scoped, tag = 'scoped memory for tpu_custom_call.1']
    #allocation5 [shape = 'u8[196608]{0}', space=vmem, size = 0x30000, scoped, tag = 'input window, operand 1, single buffered']
    #allocation6 [shape = 's32[1]{0}', space=sflag, size = 0x4, scoped, tag = 'scoped memory for tpu_custom_call.1']
    #allocation7 [shape = 'u8[1024]{0}', space=vmem, size = 0x400, scoped, tag = 'output window, operand 0, single buffered']
    %8 = vsyncpa [#allocation3], 0
    %9 = vsyncpa [#allocation6], 0
    %10 = vsyncpa [#allocation4], 0
    // Predicated region
    $region2: #{tpu_custom_call.1} parent=1 // pred_check
      _
    $region3: #{tpu_custom_call.1} parent=1 // pred_check_branch
      %12 = sbr.rel (0) target = $region5
    $region4: #{tpu_custom_call.1} parent=1 // pred_region
      %14 = vsyncadd [#allocation3], 0
      %s16 = sshll.u32 %s0, 4
      %s17 = int_to_ptr.hbm [resolvable:$true] %s16
      %s18 = sshll.u32 [#allocation2], 4
      %s19 = int_to_ptr.vmem [resolvable:$true] %s18
      %21 = dma.hbm_to_vmem [thread:$0]  %s17, 96, %s19, [#allocation3]
    $region5: #{tpu_custom_call.1} parent=1 // pred_fallthru
      _
    // Predicated region
    $region6: #{tpu_custom_call.1} parent=1 // pred_check
      _
    $region7: #{tpu_custom_call.1} parent=1 // pred_check_branch
      %23 = sbr.rel (0) target = $region9
    $region8: #{tpu_custom_call.1} parent=1 // pred_region
      %25 = vsyncadd [#allocation6], 0
      %s26 = sshll.u32 %s1, 4
      %s27 = int_to_ptr.hbm [resolvable:$true] %s26
      %s28 = sshll.u32 [#allocation5], 4
      %s29 = int_to_ptr.vmem [resolvable:$true] %s28
      %34 = dma.hbm_to_vmem [thread:$0]  %s27, 6144, %s29, [#allocation6], 64, 64, 4
    $region9: #{tpu_custom_call.1} parent=1 // pred_fallthru
      _
    // Predicated region
    $region10: #{tpu_custom_call.1} parent=1 // pred_check
      _
    $region11: #{tpu_custom_call.1} parent=1 // pred_check_branch
      %36 = sbr.rel (0) target = $region13
    $region12: #{tpu_custom_call.1} parent=1 // pred_region
      _
    $region13: #{tpu_custom_call.1} parent=1 // pred_fallthru
      _
    // Predicated region
    $region14: #{tpu_custom_call.1} parent=1 // pred_check
      _
    $region15: #{tpu_custom_call.1} parent=1 // pred_check_branch
      %38 = sbr.rel (0) target = $region17
    $region16: #{tpu_custom_call.1} parent=1 // pred_region
      %40 = dma.done [#allocation3], 96
    $region17: #{tpu_custom_call.1} parent=1 // pred_fallthru
      _
    // Predicated region
    $region18: #{tpu_custom_call.1} parent=1 // pred_check
      _
    $region19: #{tpu_custom_call.1} parent=1 // pred_check_branch
      %42 = sbr.rel (0) target = $region21
    $region20: #{tpu_custom_call.1} parent=1 // pred_region
      %44 = dma.done [#allocation6], 6144
    $region21: #{tpu_custom_call.1} parent=1 // pred_fallthru
      _
    %v45 = vld [vmem:[#allocation2] sm:$0x3f]
    %v46 = vld [vmem:[#allocation5] sm:$0xf]
    %v47 = vld [vmem:[#allocation5 + $0x4] sm:$0xf]
    %v48 = vld [vmem:[#allocation5 + $0x8] sm:$0xf]
    %v49 = vld [vmem:[#allocation5 + $0xc] sm:$0xf]
    %v50 = vld [vmem:[#allocation5 + $0x10] sm:$0xf]
    %v51 = vld [vmem:[#allocation5 + $0x14] sm:$0xf]
    %v52 = vld [vmem:[#allocation5 + $0x18] sm:$0xf]
    %v53 = vld [vmem:[#allocation5 + $0x1c] sm:$0xf]
    %v54 = vld [vmem:[#allocation5 + $0x20] sm:$0xf]
    %v55 = vld [vmem:[#allocation5 + $0x24] sm:$0xf]
    %v56 = vld [vmem:[#allocation5 + $0x28] sm:$0xf]
    %v57 = vld [vmem:[#allocation5 + $0x2c] sm:$0xf]
    %v58 = vld [vmem:[#allocation5 + $0x30] sm:$0xf]
    %v59 = vld [vmem:[#allocation5 + $0x34] sm:$0xf]
    %v60 = vld [vmem:[#allocation5 + $0x38] sm:$0xf]
    %v61 = vld [vmem:[#allocation5 + $0x3c] sm:$0xf]
    %v62 = vld [vmem:[#allocation5 + $0x40] sm:$0xf]
    %v63 = vld [vmem:[#allocation5 + $0x44] sm:$0xf]
    %v64 = vld [vmem:[#allocation5 + $0x48] sm:$0xf]
    %v65 = vld [vmem:[#allocation5 + $0x4c] sm:$0xf]
    %v66 = vld [vmem:[#allocation5 + $0x50] sm:$0xf]
    %v67 = vld [vmem:[#allocation5 + $0x54] sm:$0xf]
    %v68 = vld [vmem:[#allocation5 + $0x58] sm:$0xf]
    %v69 = vld [vmem:[#allocation5 + $0x5c] sm:$0xf]
    %v70 = vld [vmem:[#allocation5 + $0x60] sm:$0xf]
    %v71 = vld [vmem:[#allocation5 + $0x64] sm:$0xf]
    %v72 = vld [vmem:[#allocation5 + $0x68] sm:$0xf]
    %v73 = vld [vmem:[#allocation5 + $0x6c] sm:$0xf]
    %v74 = vld [vmem:[#allocation5 + $0x70] sm:$0xf]
    %v75 = vld [vmem:[#allocation5 + $0x74] sm:$0xf]
    %v76 = vld [vmem:[#allocation5 + $0x78] sm:$0xf]
    %v77 = vld [vmem:[#allocation5 + $0x7c] sm:$0xf]
    %v78 = vld [vmem:[#allocation5 + $0x80] sm:$0xf]
    %v79 = vld [vmem:[#allocation5 + $0x84] sm:$0xf]
    %v80 = vld [vmem:[#allocation5 + $0x88] sm:$0xf]
    %v81 = vld [vmem:[#allocation5 + $0x8c] sm:$0xf]
    %v82 = vld [vmem:[#allocation5 + $0x90] sm:$0xf]
    %v83 = vld [vmem:[#allocation5 + $0x94] sm:$0xf]
    %v84 = vld [vmem:[#allocation5 + $0x98] sm:$0xf]
    %v85 = vld [vmem:[#allocation5 + $0x9c] sm:$0xf]
    %v86 = vld [vmem:[#allocation5 + $0xa0] sm:$0xf]
    %v87 = vld [vmem:[#allocation5 + $0xa4] sm:$0xf]
    %v88 = vld [vmem:[#allocation5 + $0xa8] sm:$0xf]
    %v89 = vld [vmem:[#allocation5 + $0xac] sm:$0xf]
    %v90 = vld [vmem:[#allocation5 + $0xb0] sm:$0xf]
    %v91 = vld [vmem:[#allocation5 + $0xb4] sm:$0xf]
    %v92 = vld [vmem:[#allocation5 + $0xb8] sm:$0xf]
    %v93 = vld [vmem:[#allocation5 + $0xbc] sm:$0xf]
    %v94 = vld [vmem:[#allocation5 + $0xc0] sm:$0xf]
    %v95 = vld [vmem:[#allocation5 + $0xc4] sm:$0xf]
    %v96 = vld [vmem:[#allocation5 + $0xc8] sm:$0xf]
    %v97 = vld [vmem:[#allocation5 + $0xcc] sm:$0xf]
    %v98 = vld [vmem:[#allocation5 + $0xd0] sm:$0xf]
    %v99 = vld [vmem:[#allocation5 + $0xd4] sm:$0xf]
    %v100 = vld [vmem:[#allocation5 + $0xd8] sm:$0xf]
    %v101 = vld [vmem:[#allocation5 + $0xdc] sm:$0xf]
    %v102 = vld [vmem:[#allocation5 + $0xe0] sm:$0xf]
    %v103 = vld [vmem:[#allocation5 + $0xe4] sm:$0xf]
    %v104 = vld [vmem:[#allocation5 + $0xe8] sm:$0xf]
    %v105 = vld [vmem:[#allocation5 + $0xec] sm:$0xf]
    %v106 = vld [vmem:[#allocation5 + $0xf0] sm:$0xf]
    %v107 = vld [vmem:[#allocation5 + $0xf4] sm:$0xf]
    %v108 = vld [vmem:[#allocation5 + $0xf8] sm:$0xf]
    %v109 = vld [vmem:[#allocation5 + $0xfc] sm:$0xf]
    %v110 = vld [vmem:[#allocation5 + $0x100] sm:$0xf]
    %v111 = vld [vmem:[#allocation5 + $0x104] sm:$0xf]
    %v112 = vld [vmem:[#allocation5 + $0x108] sm:$0xf]
    %v113 = vld [vmem:[#allocation5 + $0x10c] sm:$0xf]
    %v114 = vld [vmem:[#allocation5 + $0x110] sm:$0xf]
    %v115 = vld [vmem:[#allocation5 + $0x114] sm:$0xf]
    %v116 = vld [vmem:[#allocation5 + $0x118] sm:$0xf]
    %v117 = vld [vmem:[#allocation5 + $0x11c] sm:$0xf]
    %v118 = vld [vmem:[#allocation5 + $0x120] sm:$0xf]
    %v119 = vld [vmem:[#allocation5 + $0x124] sm:$0xf]
    %v120 = vld [vmem:[#allocation5 + $0x128] sm:$0xf]
    %v121 = vld [vmem:[#allocation5 + $0x12c] sm:$0xf]
    %v122 = vld [vmem:[#allocation5 + $0x130] sm:$0xf]
    %v123 = vld [vmem:[#allocation5 + $0x134] sm:$0xf]
    %v124 = vld [vmem:[#allocation5 + $0x138] sm:$0xf]
    %v125 = vld [vmem:[#allocation5 + $0x13c] sm:$0xf]
    %v126 = vld [vmem:[#allocation5 + $0x140] sm:$0xf]
    %v127 = vld [vmem:[#allocation5 + $0x144] sm:$0xf]
    %v128 = vld [vmem:[#allocation5 + $0x148] sm:$0xf]
    %v129 = vld [vmem:[#allocation5 + $0x14c] sm:$0xf]
    %v130 = vld [vmem:[#allocation5 + $0x150] sm:$0xf]
    %v131 = vld [vmem:[#allocation5 + $0x154] sm:$0xf]
    %v132 = vld [vmem:[#allocation5 + $0x158] sm:$0xf]
    %v133 = vld [vmem:[#allocation5 + $0x15c] sm:$0xf]
    %v134 = vld [vmem:[#allocation5 + $0x160] sm:$0xf]
    %v135 = vld [vmem:[#allocation5 + $0x164] sm:$0xf]
    %v136 = vld [vmem:[#allocation5 + $0x168] sm:$0xf]
    %v137 = vld [vmem:[#allocation5 + $0x16c] sm:$0xf]
    %v138 = vld [vmem:[#allocation5 + $0x170] sm:$0xf]
    %v139 = vld [vmem:[#allocation5 + $0x174] sm:$0xf]
    %v140 = vld [vmem:[#allocation5 + $0x178] sm:$0xf]
    %v141 = vld [vmem:[#allocation5 + $0x17c] sm:$0xf]
    %v142 = vld [vmem:[%s2] sm:$0x1]
    %v144 = vperm.slane %v142, 0
    %147 = vst [vmem:[#allocation1] ss:$9 sm:$0xff] %v45
    %v148 = vld [vmem:[#allocation1] sm:$0xff]
    %v149 = vld [vmem:[#allocation1 + $0x9] sm:$0xff]
    %v150 = vld [vmem:[#allocation1 + $0x12] sm:$0xff]
    %v151 = vld [vmem:[#allocation1 + $0x1b] sm:$0xff]
    %v152 = vld [vmem:[#allocation1 + $0x24] sm:$0xff]
    %v153 = vld [vmem:[#allocation1 + $0x2d] sm:$0xff]
    %v256 = vunpack.c.l.b16 %v46
    %v257 = vunpack.c.l.b16 %v47
    %v258 = vunpack.c.l.b16 %v48
    %v259 = vunpack.c.l.b16 %v49
    %v260 = vunpack.c.l.b16 %v50
    %v261 = vunpack.c.l.b16 %v51
    %v262 = vunpack.c.l.b16 %v52
    %v263 = vunpack.c.l.b16 %v53
    %v264 = vunpack.c.l.b16 %v54
    %v265 = vunpack.c.l.b16 %v55
    %v266 = vunpack.c.l.b16 %v56
    %v267 = vunpack.c.l.b16 %v57
    %v268 = vunpack.c.l.b16 %v58
    %v269 = vunpack.c.l.b16 %v59
    %v270 = vunpack.c.l.b16 %v60
    %v271 = vunpack.c.l.b16 %v61
    %v272 = vunpack.c.l.b16 %v62
    %v273 = vunpack.c.l.b16 %v63
    %v274 = vunpack.c.l.b16 %v64
    %v275 = vunpack.c.l.b16 %v65
    %v276 = vunpack.c.l.b16 %v66
    %v277 = vunpack.c.l.b16 %v67
    %v278 = vunpack.c.l.b16 %v68
    %v279 = vunpack.c.l.b16 %v69
    %v280 = vunpack.c.l.b16 %v70
    %v281 = vunpack.c.l.b16 %v71
    %v282 = vunpack.c.l.b16 %v72
    %v283 = vunpack.c.l.b16 %v73
    %v284 = vunpack.c.l.b16 %v74
    %v285 = vunpack.c.l.b16 %v75
    %v286 = vunpack.c.l.b16 %v76
    %v287 = vunpack.c.l.b16 %v77
    %v288 = vunpack.c.l.b16 %v78
    %v289 = vunpack.c.l.b16 %v79
    %v290 = vunpack.c.l.b16 %v80
    %v291 = vunpack.c.l.b16 %v81
    %v292 = vunpack.c.l.b16 %v82
    %v293 = vunpack.c.l.b16 %v83
    %v294 = vunpack.c.l.b16 %v84
    %v295 = vunpack.c.l.b16 %v85
    %v296 = vunpack.c.l.b16 %v86
    %v297 = vunpack.c.l.b16 %v87
    %v298 = vunpack.c.l.b16 %v88
    %v299 = vunpack.c.l.b16 %v89
    %v300 = vunpack.c.l.b16 %v90
    %v301 = vunpack.c.l.b16 %v91
    %v302 = vunpack.c.l.b16 %v92
    %v303 = vunpack.c.l.b16 %v93
    %v304 = vunpack.c.l.b16 %v94
    %v305 = vunpack.c.l.b16 %v95
    %v306 = vunpack.c.l.b16 %v96
    %v307 = vunpack.c.l.b16 %v97
    %v308 = vunpack.c.l.b16 %v98
    %v309 = vunpack.c.l.b16 %v99
    %v310 = vunpack.c.l.b16 %v100
    %v311 = vunpack.c.l.b16 %v101
    %v312 = vunpack.c.l.b16 %v102
    %v313 = vunpack.c.l.b16 %v103
    %v314 = vunpack.c.l.b16 %v104
    %v315 = vunpack.c.l.b16 %v105
    %v316 = vunpack.c.l.b16 %v106
    %v317 = vunpack.c.l.b16 %v107
    %v318 = vunpack.c.l.b16 %v108
    %v319 = vunpack.c.l.b16 %v109
    %v320 = vunpack.c.l.b16 %v110
    %v321 = vunpack.c.l.b16 %v111
    %v322 = vunpack.c.l.b16 %v112
    %v323 = vunpack.c.l.b16 %v113
    %v324 = vunpack.c.l.b16 %v114
    %v325 = vunpack.c.l.b16 %v115
    %v326 = vunpack.c.l.b16 %v116
    %v327 = vunpack.c.l.b16 %v117
    %v328 = vunpack.c.l.b16 %v118
    %v329 = vunpack.c.l.b16 %v119
    %v330 = vunpack.c.l.b16 %v120
    %v331 = vunpack.c.l.b16 %v121
    %v332 = vunpack.c.l.b16 %v122
    %v333 = vunpack.c.l.b16 %v123
    %v334 = vunpack.c.l.b16 %v124
    %v335 = vunpack.c.l.b16 %v125
    %v336 = vunpack.c.l.b16 %v126
    %v337 = vunpack.c.l.b16 %v127
    %v338 = vunpack.c.l.b16 %v128
    %v339 = vunpack.c.l.b16 %v129
    %v340 = vunpack.c.l.b16 %v130
    %v341 = vunpack.c.l.b16 %v131
    %v342 = vunpack.c.l.b16 %v132
    %v343 = vunpack.c.l.b16 %v133
    %v344 = vunpack.c.l.b16 %v134
    %v345 = vunpack.c.l.b16 %v135
    %v346 = vunpack.c.l.b16 %v136
    %v347 = vunpack.c.l.b16 %v137
    %v348 = vunpack.c.l.b16 %v138
    %v349 = vunpack.c.l.b16 %v139
    %v350 = vunpack.c.l.b16 %v140
    %v351 = vunpack.c.l.b16 %v141
    %v352 = vpack.c.b16 %v257, %v256
    %v353 = vpack.c.b16 %v259, %v258
    %v354 = vpack.c.b16 %v261, %v260
    %v355 = vpack.c.b16 %v263, %v262
    %v356 = vpack.c.b16 %v265, %v264
    %v357 = vpack.c.b16 %v267, %v266
    %v358 = vpack.c.b16 %v269, %v268
    %v359 = vpack.c.b16 %v271, %v270
    %v360 = vpack.c.b16 %v273, %v272
    %v361 = vpack.c.b16 %v275, %v274
    %v362 = vpack.c.b16 %v277, %v276
    %v363 = vpack.c.b16 %v279, %v278
    %v364 = vpack.c.b16 %v281, %v280
    %v365 = vpack.c.b16 %v283, %v282
    %v366 = vpack.c.b16 %v285, %v284
    %v367 = vpack.c.b16 %v287, %v286
    %v368 = vpack.c.b16 %v289, %v288
    %v369 = vpack.c.b16 %v291, %v290
    %v370 = vpack.c.b16 %v293, %v292
    %v371 = vpack.c.b16 %v295, %v294
    %v372 = vpack.c.b16 %v297, %v296
    %v373 = vpack.c.b16 %v299, %v298
    %v374 = vpack.c.b16 %v301, %v300
    %v375 = vpack.c.b16 %v303, %v302
    %v376 = vpack.c.b16 %v305, %v304
    %v377 = vpack.c.b16 %v307, %v306
    %v378 = vpack.c.b16 %v309, %v308
    %v379 = vpack.c.b16 %v311, %v310
    %v380 = vpack.c.b16 %v313, %v312
    %v381 = vpack.c.b16 %v315, %v314
    %v382 = vpack.c.b16 %v317, %v316
    %v383 = vpack.c.b16 %v319, %v318
    %v384 = vpack.c.b16 %v321, %v320
    %v385 = vpack.c.b16 %v323, %v322
    %v386 = vpack.c.b16 %v325, %v324
    %v387 = vpack.c.b16 %v327, %v326
    %v388 = vpack.c.b16 %v329, %v328
    %v389 = vpack.c.b16 %v331, %v330
    %v390 = vpack.c.b16 %v333, %v332
    %v391 = vpack.c.b16 %v335, %v334
    %v392 = vpack.c.b16 %v337, %v336
    %v393 = vpack.c.b16 %v339, %v338
    %v394 = vpack.c.b16 %v341, %v340
    %v395 = vpack.c.b16 %v343, %v342
    %v396 = vpack.c.b16 %v345, %v344
    %v397 = vpack.c.b16 %v347, %v346
    %v398 = vpack.c.b16 %v349, %v348
    %v399 = vpack.c.b16 %v351, %v350
    %448 = vmatpush.bf16.msra.mxu0 %v359
    %449 = vmatpush.bf16.msra.mxu0 %v358
    %450 = vmatpush.bf16.msra.mxu0 %v357
    %451 = vmatpush.bf16.msra.mxu0 %v356
    %452 = vmatpush.bf16.msra.mxu0 %v355
    %453 = vmatpush.bf16.msra.mxu0 %v354
    %454 = vmatpush.bf16.msra.mxu0 %v353
    %455 = vmatpush.bf16.msra.mxu0 %v352
    %456 = vmatmul.bf16.gmra.mxu0 %v148
    %v457 = vpop.f32.mrf.mxu0
    %v458 = vadd.f32 %v144, %v457
    %v459 = vpop.f32.mrf.mxu0
    %460 = vdwg.mxu0
    %461 = vmatpush.bf16.msra.mxu0 %v367
    %462 = vmatpush.bf16.msra.mxu0 %v366
    %463 = vmatpush.bf16.msra.mxu0 %v365
    %464 = vmatpush.bf16.msra.mxu0 %v364
    %465 = vmatpush.bf16.msra.mxu0 %v363
    %466 = vmatpush.bf16.msra.mxu0 %v362
    %467 = vmatpush.bf16.msra.mxu0 %v361
    %468 = vmatpush.bf16.msra.mxu0 %v360
    %469 = vmatmul.bf16.gmra.mxu0 %v149
    %v470 = vpop.f32.mrf.mxu0
    %v471 = vadd.f32 %v458, %v470
    %v472 = vpop.f32.mrf.mxu0
    %473 = vdwg.mxu0
    %474 = vmatpush.bf16.msra.mxu0 %v375
    %475 = vmatpush.bf16.msra.mxu0 %v374
    %476 = vmatpush.bf16.msra.mxu0 %v373
    %477 = vmatpush.bf16.msra.mxu0 %v372
    %478 = vmatpush.bf16.msra.mxu0 %v371
    %479 = vmatpush.bf16.msra.mxu0 %v370
    %480 = vmatpush.bf16.msra.mxu0 %v369
    %481 = vmatpush.bf16.msra.mxu0 %v368
    %482 = vmatmul.bf16.gmra.mxu0 %v150
    %v483 = vpop.f32.mrf.mxu0
    %v484 = vadd.f32 %v471, %v483
    %v485 = vpop.f32.mrf.mxu0
    %486 = vdwg.mxu0
    %487 = vmatpush.bf16.msra.mxu0 %v383
    %488 = vmatpush.bf16.msra.mxu0 %v382
    %489 = vmatpush.bf16.msra.mxu0 %v381
    %490 = vmatpush.bf16.msra.mxu0 %v380
    %491 = vmatpush.bf16.msra.mxu0 %v379
    %492 = vmatpush.bf16.msra.mxu0 %v378
    %493 = vmatpush.bf16.msra.mxu0 %v377
    %494 = vmatpush.bf16.msra.mxu0 %v376
    %495 = vmatmul.bf16.gmra.mxu0 %v151
    %v496 = vpop.f32.mrf.mxu0
    %v497 = vadd.f32 %v484, %v496
    %v498 = vpop.f32.mrf.mxu0
    %499 = vdwg.mxu0
    %500 = vmatpush.bf16.msra.mxu0 %v391
    %501 = vmatpush.bf16.msra.mxu0 %v390
    %502 = vmatpush.bf16.msra.mxu0 %v389
    %503 = vmatpush.bf16.msra.mxu0 %v388
    %504 = vmatpush.bf16.msra.mxu0 %v387
    %505 = vmatpush.bf16.msra.mxu0 %v386
    %506 = vmatpush.bf16.msra.mxu0 %v385
    %507 = vmatpush.bf16.msra.mxu0 %v384
    %508 = vmatmul.bf16.gmra.mxu0 %v152
    %v509 = vpop.f32.mrf.mxu0
    %v510 = vadd.f32 %v497, %v509
    %v511 = vpop.f32.mrf.mxu0
    %512 = vdwg.mxu0
    %513 = vmatpush.bf16.msra.mxu0 %v399
    %514 = vmatpush.bf16.msra.mxu0 %v398
    %515 = vmatpush.bf16.msra.mxu0 %v397
    %516 = vmatpush.bf16.msra.mxu0 %v396
    %517 = vmatpush.bf16.msra.mxu0 %v395
    %518 = vmatpush.bf16.msra.mxu0 %v394
    %519 = vmatpush.bf16.msra.mxu0 %v393
    %520 = vmatpush.bf16.msra.mxu0 %v392
    %521 = vmatmul.bf16.gmra.mxu0 %v153
    %v522 = vpop.f32.mrf.mxu0
    %v523 = vadd.f32 %v510, %v522
    %v524 = vpop.f32.mrf.mxu0
    %525 = vdwg.mxu0
    %526 = vst [vmem:[#allocation7] sm:$0x3] %v523
    // Predicated region
    $region22: #{tpu_custom_call.1} parent=1 // pred_check
      _
    $region23: #{tpu_custom_call.1} parent=1 // pred_check_branch
      %528 = sbr.rel (0) target = $region25
    $region24: #{tpu_custom_call.1} parent=1 // pred_region
      %530 = vsyncadd [#allocation4], 0
      %s532 = sshll.u32 [#allocation7], 4
      %s533 = int_to_ptr.vmem [resolvable:$true] %s532
      %s534 = sshll.u32 %s3, 4
      %s535 = int_to_ptr.hbm [resolvable:$true] %s534
      %537 = dma.vmem_to_hbm [thread:$0]  %s533, 32, %s535, [#allocation4]
    $region25: #{tpu_custom_call.1} parent=1 // pred_fallthru
      _
    // Predicated region
    $region26: #{tpu_custom_call.1} parent=1 // pred_check
      _
    $region27: #{tpu_custom_call.1} parent=1 // pred_check_branch
      %539 = sbr.rel (0) target = $region29
    $region28: #{tpu_custom_call.1} parent=1 // pred_region
      %541 = dma.done [#allocation4], 32
    $region29: #{tpu_custom_call.1} parent=1 // pred_fallthru
      _
    %542 = vsyncpa [#allocation3], 1
    %543 = vsyncpa [#allocation6], 1
    %544 = vsyncpa [#allocation4], 1

</llo_original>
